<compile_context>
chip_gen: v7x
topology: tpu7x:2x2x1
jax: 0.10.0
libtpu: 0.0.40
codegen_flags: <defaults>
</compile_context>

<pallas_src>
import functools

import jax
import jax.numpy as jnp
from jax import lax
from jax.experimental import pallas as pl
from jax.experimental.pallas import tpu as pltpu

LANE = 128        # lane width (last dim of every block)
ROW_ALIGN = 32    # sublane multiple safe for f32 / bf16 / int8 input blocks
MAX_BLK_R = 4096  # (4096, 128) f32 block = 2 MiB per input (8 MiB double-buffered)
NUM_CORES = 2     # leading "parallel" axis: both TCs on dual-TC parts, loop of 2 elsewhere


def _cdiv(a, b):
    return -(-a // b)


def _round_up(a, b):
    return _cdiv(a, b) * b


def _focal_kernel(x_ref, y_ref, out_ref, acc_ref, *, alpha, gamma, blk_r,
                  blocks_per_core, num_blocks, tail_valid, needs_mask, has_ghost):
    c = pl.program_id(0)            # core-split axis ("parallel")
    i = pl.program_id(1)            # reduction axis ("arbitrary")
    nb = pl.num_programs(1)

    @pl.when(i == 0)
    def _():
        acc_ref[...] = jnp.zeros_like(acc_ref)

    gblk = c * blocks_per_core + i  # global block index

    def _accumulate(vals):
        # Pure VPU adds into the (8, 128) accumulator; cross-lane reduce only at the end.
        acc_ref[...] += vals.reshape(blk_r // 8, 8, LANE).sum(axis=0)

    def _do_block():
        x = x_ref[...].astype(jnp.float32)   # logits
        y = y_ref[...].astype(jnp.float32)   # targets (hard or soft), cast on VPU

        # Numerically-stable BCE-with-logits (valid for soft targets too):
        #   ce = max(x, 0) - x*y + log1p(exp(-|x|))
        ce = jnp.maximum(x, 0.0) - x * y + jnp.log1p(jnp.exp(-jnp.abs(x)))
        one_minus_pt = 1.0 - jnp.exp(-ce)    # exact 1 - p_t (no approx reciprocal)

        g = float(gamma)
        if g == 2.0:
            w = one_minus_pt * one_minus_pt  # VPU square, no pow() on EUP
        elif g == int(g) and g >= 1.0:
            w = one_minus_pt
            for _ in range(int(g) - 1):
                w = w * one_minus_pt
        else:
            w = one_minus_pt ** g
        focal = w * ce
        if float(alpha) != 1.0:              # static skip when alpha == 1
            focal = float(alpha) * focal

        if needs_mask:
            # All invalid (padded / partial-block garbage) elements live in the
            # last real block; only that block pays for the mask math, and the
            # index is block-local so it can never overflow int32.
            tail_blk = num_blocks - 1

            @pl.when(gblk == tail_blk)
            def _():
                row = lax.broadcasted_iota(jnp.int32, focal.shape, 0)
                col = lax.broadcasted_iota(jnp.int32, focal.shape, 1)
                _accumulate(jnp.where(row * LANE + col < tail_valid, focal, 0.0))

            @pl.when(gblk != tail_blk)
            def _():
                _accumulate(focal)
        else:
            _accumulate(focal)

    if has_ghost:
        # Uneven core split: the clamped index_map re-fetches the last real block
        # for the "ghost" step; skip its compute so nothing is double counted.
        pl.when(gblk < num_blocks)(_do_block)
    else:
        _do_block()

    @pl.when(i == nb - 1)
    def _():
        # Lane-dense per-core partials (128 lanes x num_cores rows); the tiny
        # final reduction happens in the wrapper.
        out_ref[...] = acc_ref[...].sum(axis=0, keepdims=True).reshape(1, 1, LANE)


def binary_focal_loss(preds, truth, alpha=1.0, gamma=2.0, block_rows=MAX_BLK_R):
    """preds: (N, 1, H, W) logits; truth: (N, H, W) targets. Returns scalar f32 mean focal loss."""
    x = jnp.squeeze(preds, axis=1)
    y = truth
    if y.dtype == jnp.bool_:
        y = y.astype(jnp.int8)  # keep the target stream at 1 B/elem through the DMA
    assert x.shape == y.shape, (x.shape, y.shape)

    n_valid = int(x.size)
    assert n_valid > 0

    xf = x.reshape(-1)
    yf = y.reshape(-1)

    # Zero-copy path whenever the element count is lane-divisible (typical for
    # N*H*W image shapes); otherwise pad only up to the next lane multiple.
    if n_valid % LANE != 0:
        pad = LANE - n_valid % LANE
        xf = jnp.pad(xf, (0, pad))
        yf = jnp.pad(yf, (0, pad))
    rows = xf.size // LANE
    x2 = xf.reshape(rows, LANE)
    y2 = yf.reshape(rows, LANE)

    # Static tiling decisions (Python ints). blk_r is a multiple of 32 so the
    # block satisfies the (8,128)/(16,128)/(32,128) tiling for f32/bf16/int8;
    # the last block may be partial (ragged tail handled by the in-kernel mask).
    blk_r = _round_up(min(int(block_rows), _round_up(rows, ROW_ALIGN)), ROW_ALIGN)
    num_blocks = _cdiv(rows, blk_r)

    num_cores = NUM_CORES if num_blocks >= NUM_CORES else 1
    blocks_per_core = _cdiv(num_blocks, num_cores)
    has_ghost = num_cores * blocks_per_core > num_blocks

    needs_mask = (num_blocks * blk_r * LANE) != n_valid
    tail_valid = n_valid - (num_blocks - 1) * blk_r * LANE  # valid elems in last block

    def in_map(c, i):
        g = c * blocks_per_core + i
        if has_ghost:
            g = jnp.minimum(g, num_blocks - 1)  # clamp ghost step to a real block
        return (g, 0)

    kernel = functools.partial(
        _focal_kernel,
        alpha=float(alpha), gamma=float(gamma), blk_r=blk_r,
        blocks_per_core=blocks_per_core, num_blocks=num_blocks,
        tail_valid=tail_valid, needs_mask=needs_mask, has_ghost=has_ghost,
    )

    bytes_accessed = int(
        x2.size * x2.dtype.itemsize + y2.size * y2.dtype.itemsize
        + num_cores * LANE * 4
    )

    partials = pl.pallas_call(
        kernel,
        out_shape=jax.ShapeDtypeStruct((num_cores, 1, LANE), jnp.float32),
        grid_spec=pltpu.PrefetchScalarGridSpec(
            num_scalar_prefetch=0,
            grid=(num_cores, blocks_per_core),
            in_specs=[
                pl.BlockSpec((blk_r, LANE), in_map),
                pl.BlockSpec((blk_r, LANE), in_map),
            ],
            out_specs=pl.BlockSpec((1, 1, LANE), lambda c, i: (c, 0, 0)),
            scratch_shapes=[pltpu.VMEM((8, LANE), jnp.float32)],
        ),
        compiler_params=pltpu.CompilerParams(
            dimension_semantics=("parallel", "arbitrary"),
        ),
        cost_estimate=pl.CostEstimate(
            flops=12 * n_valid,
            transcendentals=3 * n_valid,
            bytes_accessed=bytes_accessed,
        ),
    )(x2, y2)

    return jnp.sum(partials) / jnp.float32(n_valid)


def _reference(preds, truth, alpha=1.0, gamma=2.0):
    x = jnp.squeeze(preds, axis=1).astype(jnp.float32)
    y = truth.astype(jnp.float32)
    ce = jnp.maximum(x, 0.0) - x * y + jnp.log1p(jnp.exp(-jnp.abs(x)))
    focal = alpha * (1.0 - jnp.exp(-ce)) ** gamma * ce
    return jnp.mean(focal)


if __name__ == "__main__":
    key = jax.random.PRNGKey(0)
    k1, k2, k3, k4 = jax.random.split(key, 4)

    loss_fn = jax.jit(binary_focal_loss, static_argnames=("alpha", "gamma", "block_rows"))

    # Small shape consistent with the module: preds (N, 1, H, W) logits, truth (N, H, W).
    N, H, W = 2, 16, 16
    preds = jax.random.normal(k1, (N, 1, H, W), dtype=jnp.float32) * 2.0
    truth = (jax.random.uniform(k2, (N, H, W)) > 0.5).astype(jnp.float32)

    out = jax.block_until_ready(loss_fn(preds, truth))
    ref = _reference(preds, truth)
    assert jnp.allclose(out, ref, atol=1e-5, rtol=1e-5), (out, ref)

    # Second small check exercising multi-block accumulation, the 2-way core
    # split, the clamped "ghost" block, the hoisted tail mask and an int8
    # (narrow) target stream, by forcing a tiny block size.
    N2, H2, W2 = 2, 48, 96
    preds2 = jax.random.normal(k3, (N2, 1, H2, W2), dtype=jnp.float32) * 3.0
    truth2 = (jax.random.uniform(k4, (N2, H2, W2)) > 0.3).astype(jnp.int8)

    out2 = jax.block_until_ready(loss_fn(preds2, truth2, block_rows=32))
    ref2 = _reference(preds2, truth2)
    assert jnp.allclose(out2, ref2, atol=1e-5, rtol=1e-5), (out2, ref2)

    print("KERNEL_OK")
</pallas_src>

<mosaic_0001>
module attributes {stable_mosaic.version = 11 : i64} {
  func.func @_focal_kernel(%arg0: i32, %arg1: i32, %arg2: memref<32x128xf32, #tpu.memory_space<vmem>>, %arg3: memref<32x128xf32, #tpu.memory_space<vmem>>, %arg4: memref<1x1x128xf32, #tpu.memory_space<vmem>>, %arg5: memref<8x128xf32, #tpu.memory_space<vmem>>) attributes {dimension_semantics = [#tpu.dimension_semantics<parallel>, #tpu.dimension_semantics<arbitrary>], iteration_bounds = array<i64: 1, 1>, scalar_prefetch = 0 : i64, scratch_operands = 1 : i64, tpu.core_type = #tpu.core_type<tc>, window_params = [{transform_indices = @transform_0, window_bounds = array<i64: 32, 128>}, {transform_indices = @transform_1, window_bounds = array<i64: 32, 128>}, {transform_indices = @transform_2, window_bounds = array<i64: 1, 1, 128>}]} {
    %c0_i32 = arith.constant 0 : i32
    %0 = arith.cmpi eq, %arg1, %c0_i32 : i32
    %1 = arith.extui %0 : i1 to i32
    %c0_i32_0 = arith.constant 0 : i32
    %2 = arith.cmpi ne, %1, %c0_i32_0 : i32
    scf.if %2 {
      %cst_13 = arith.constant 0.000000e+00 : f32
      %33 = vector.broadcast %cst_13 : f32 to vector<8x128xf32>
      %c0_14 = arith.constant 0 : index
      %c0_15 = arith.constant 0 : index
      %34 = vector.load %arg5[%c0_14, %c0_15] : memref<8x128xf32, #tpu.memory_space<vmem>>, vector<8x128xf32>
      tpu.vector_store %arg5[%c0_14, %c0_15], %33 {strides = array<i32>} : memref<8x128xf32, #tpu.memory_space<vmem>>, vector<8x128xf32>,
    } else {
    }
    %c1_i32 = arith.constant 1 : i32
    %3 = arith.muli %arg0, %c1_i32 : i32
    %4 = arith.addi %3, %arg1 : i32
    %c0 = arith.constant 0 : index
    %c0_1 = arith.constant 0 : index
    %5 = vector.load %arg2[%c0, %c0_1] : memref<32x128xf32, #tpu.memory_space<vmem>>, vector<32x128xf32>
    %c0_2 = arith.constant 0 : index
    %c0_3 = arith.constant 0 : index
    %6 = vector.load %arg3[%c0_2, %c0_3] : memref<32x128xf32, #tpu.memory_space<vmem>>, vector<32x128xf32>
    %cst = arith.constant 0.000000e+00 : f32
    %7 = vector.broadcast %cst : f32 to vector<32x128xf32>
    %8 = arith.maximumf %5, %7 : vector<32x128xf32>
    %9 = arith.mulf %5, %6 : vector<32x128xf32>
    %10 = arith.subf %8, %9 : vector<32x128xf32>
    %11 = math.absf %5 : vector<32x128xf32>
    %cst_4 = arith.constant 0.000000e+00 : f32
    %12 = vector.broadcast %cst_4 : f32 to vector<32x128xf32>
    %13 = arith.subf %12, %11 : vector<32x128xf32>
    %14 = math.exp %13 : vector<32x128xf32>
    %15 = math.log1p %14 : vector<32x128xf32>
    %16 = arith.addf %10, %15 : vector<32x128xf32>
    %cst_5 = arith.constant 0.000000e+00 : f32
    %17 = vector.broadcast %cst_5 : f32 to vector<32x128xf32>
    %18 = arith.subf %17, %16 : vector<32x128xf32>
    %19 = math.exp %18 : vector<32x128xf32>
    %cst_6 = arith.constant 1.000000e+00 : f32
    %20 = vector.broadcast %cst_6 : f32 to vector<32x128xf32>
    %21 = arith.subf %20, %19 : vector<32x128xf32>
    %22 = arith.mulf %21, %21 : vector<32x128xf32>
    %23 = arith.mulf %22, %16 : vector<32x128xf32>
    %c0_i32_7 = arith.constant 0 : i32
    %24 = arith.cmpi eq, %4, %c0_i32_7 : i32
    %25 = arith.extui %24 : i1 to i32
    %c0_i32_8 = arith.constant 0 : i32
    %26 = arith.cmpi ne, %25, %c0_i32_8 : i32
    scf.if %26 {
      %33 = tpu.iota {dimensions = array<i32: 0>} : vector<32x128xi32>
      %34 = tpu.iota {dimensions = array<i32: 1>} : vector<32x128xi32>
      %c128_i32 = arith.constant 128 : i32
      %35 = vector.broadcast %c128_i32 : i32 to vector<32x128xi32>
      %36 = arith.muli %33, %35 : vector<32x128xi32>
      %37 = arith.addi %36, %34 : vector<32x128xi32>
      %c512_i32 = arith.constant 512 : i32
      %38 = vector.broadcast %c512_i32 : i32 to vector<32x128xi32>
      %39 = arith.cmpi slt, %37, %38 : vector<32x128xi32>
      %cst_13 = arith.constant 0.000000e+00 : f32
      %40 = vector.broadcast %cst_13 : f32 to vector<32x128xf32>
      %41 = arith.select %39, %23, %40 : vector<32x128xi1>, vector<32x128xf32>
      %c0_14 = arith.constant 0 : index
      %c0_15 = arith.constant 0 : index
      %42 = vector.load %arg5[%c0_14, %c0_15] : memref<8x128xf32, #tpu.memory_space<vmem>>, vector<8x128xf32>
      %43 = vector.shape_cast %41 : vector<32x128xf32> to vector<4x8x128xf32>
      %cst_16 = arith.constant dense<0.000000e+00> : vector<8x128xf32>
      %44 = vector.multi_reduction <add>, %43, %cst_16 [0] : vector<4x8x128xf32> to vector<8x128xf32>
      %45 = arith.addf %42, %44 : vector<8x128xf32>
      %c0_17 = arith.constant 0 : index
      %c0_18 = arith.constant 0 : index
      %46 = vector.load %arg5[%c0_17, %c0_18] : memref<8x128xf32, #tpu.memory_space<vmem>>, vector<8x128xf32>
      tpu.vector_store %arg5[%c0_17, %c0_18], %45 {strides = array<i32>} : memref<8x128xf32, #tpu.memory_space<vmem>>, vector<8x128xf32>,
    } else {
    }
    %c0_i32_9 = arith.constant 0 : i32
    %27 = arith.cmpi ne, %4, %c0_i32_9 : i32
    %28 = arith.extui %27 : i1 to i32
    %c0_i32_10 = arith.constant 0 : i32
    %29 = arith.cmpi ne, %28, %c0_i32_10 : i32
    scf.if %29 {
      %c0_13 = arith.constant 0 : index
      %c0_14 = arith.constant 0 : index
      %33 = vector.load %arg5[%c0_13, %c0_14] : memref<8x128xf32, #tpu.memory_space<vmem>>, vector<8x128xf32>
      %34 = vector.shape_cast %23 : vector<32x128xf32> to vector<4x8x128xf32>
      %cst_15 = arith.constant dense<0.000000e+00> : vector<8x128xf32>
      %35 = vector.multi_reduction <add>, %34, %cst_15 [0] : vector<4x8x128xf32> to vector<8x128xf32>
      %36 = arith.addf %33, %35 : vector<8x128xf32>
      %c0_16 = arith.constant 0 : index
      %c0_17 = arith.constant 0 : index
      %37 = vector.load %arg5[%c0_16, %c0_17] : memref<8x128xf32, #tpu.memory_space<vmem>>, vector<8x128xf32>
      tpu.vector_store %arg5[%c0_16, %c0_17], %36 {strides = array<i32>} : memref<8x128xf32, #tpu.memory_space<vmem>>, vector<8x128xf32>,
    } else {
    }
    %c0_i32_11 = arith.constant 0 : i32
    %30 = arith.cmpi eq, %arg1, %c0_i32_11 : i32
    %31 = arith.extui %30 : i1 to i32
    %c0_i32_12 = arith.constant 0 : i32
    %32 = arith.cmpi ne, %31, %c0_i32_12 : i32
    scf.if %32 {
      %c0_13 = arith.constant 0 : index
      %c0_14 = arith.constant 0 : index
      %33 = vector.load %arg5[%c0_13, %c0_14] : memref<8x128xf32, #tpu.memory_space<vmem>>, vector<8x128xf32>
      %cst_15 = arith.constant dense<0.000000e+00> : vector<128xf32>
      %34 = vector.multi_reduction <add>, %33, %cst_15 [0] : vector<8x128xf32> to vector<128xf32>
      %35 = vector.shape_cast %34 : vector<128xf32> to vector<1x128xf32>
      %36 = vector.shape_cast %35 : vector<1x128xf32> to vector<1x1x128xf32>
      %c0_16 = arith.constant 0 : index
      %c0_17 = arith.constant 0 : index
      %c0_18 = arith.constant 0 : index
      %37 = vector.load %arg4[%c0_16, %c0_17, %c0_18] : memref<1x1x128xf32, #tpu.memory_space<vmem>>, vector<1x1x128xf32>
      tpu.vector_store %arg4[%c0_16, %c0_17, %c0_18], %36 {strides = array<i32>} : memref<1x1x128xf32, #tpu.memory_space<vmem>>, vector<1x1x128xf32>,
    } else {
    }
    return
  }
  func.func @transform_0(%arg0: i32, %arg1: i32) -> (i32, i32) {
    %c1_i32 = arith.constant 1 : i32
    %0 = arith.muli %arg0, %c1_i32 : i32
    %1 = arith.addi %0, %arg1 : i32
    %c0_i32 = arith.constant 0 : i32
    %c0_i32_0 = arith.constant 0 : i32
    return %1, %c0_i32 : i32, i32
  }
  func.func @transform_1(%arg0: i32, %arg1: i32) -> (i32, i32) {
    %c1_i32 = arith.constant 1 : i32
    %0 = arith.muli %arg0, %c1_i32 : i32
    %1 = arith.addi %0, %arg1 : i32
    %c0_i32 = arith.constant 0 : i32
    %c0_i32_0 = arith.constant 0 : i32
    return %1, %c0_i32 : i32, i32
  }
  func.func @transform_2(%arg0: i32, %arg1: i32) -> (i32, i32, i32) {
    %c0_i32 = arith.constant 0 : i32
    %c0_i32_0 = arith.constant 0 : i32
    %c0_i32_1 = arith.constant 0 : i32
    return %arg0, %c0_i32, %c0_i32_0 : i32, i32, i32
  }
}

</mosaic_0001>

<llo_original>
// kernel: squeeze.1
$region0: #{squeeze.1}
  %s0 = inlined_call_operand.hbm [shape: f32[2,1,16,16], index: 0, kind: input, shape index: {}]
  %s1 = inlined_call_operand.vmem [shape: f32[4,128], index: 1, kind: output, shape index: {}]
  $region1: #{squeeze.1} parent=0
    #allocation0 [shape = 'u8[16384]{0}', space=vmem, size = 0x4000, scoped, tag = 'operand span for operand 0']
    #allocation1 [shape = 's32[1]{0}', space=sflag, size = 0x4, scoped, tag = 'scoped memory for squeeze.1']
    #allocation2 [shape = 'u8[4096]{0}', space=vmem, size = 0x1000, scoped, tag = 'scoped mem for output reshape']
    %2 = vsyncpa [#allocation1], 0
    %s4 = ssub.s32 512, 512
    %5 = vsyncadd [#allocation1], %s4
    %s7 = sshll.u32 [#allocation0], 4
    %s8 = int_to_ptr.vmem [resolvable:$true] %s7
    %10 = dma.hbm_to_vmem [thread:$0]  %s0, 512, %s8, [#allocation1]
    %11 = dma.done [#allocation1], 512
    %v12 = vld [vmem:[#allocation0] ss:$8 sm:$0xf]
    %vm13 = vcmask 130048
    %14 = vst.msk [vmem:[#allocation2] sm:$0xf] %vm13, %v12
    %s15 = scalar_lea.vmem [#allocation0], 7
    %v16 = vld [vmem:[%s15] ss:$8 sm:$0xf]
    %17 = vrot.lane.b32.xlu0 %v16, 112
    %v18 = vpop.permute.xlu0 %17
    %vm19 = vcmask 1048448
    %20 = vst.msk [vmem:[#allocation2] sm:$0xf] %vm19, %v18
    %s21 = scalar_lea.vmem [#allocation0], 6
    %v22 = vld [vmem:[%s21] ss:$8 sm:$0xf]
    %23 = vrot.lane.b32.xlu0 %v22, 96
    %v24 = vpop.permute.xlu0 %23
    %vm25 = vcmask 917248
    %26 = vst.msk [vmem:[#allocation2] sm:$0xf] %vm25, %v24
    %s27 = scalar_lea.vmem [#allocation0], 5
    %v28 = vld [vmem:[%s27] ss:$8 sm:$0xf]
    %29 = vrot.lane.b32.xlu0 %v28, 80
    %v30 = vpop.permute.xlu0 %29
    %vm31 = vcmask 786048
    %32 = vst.msk [vmem:[#allocation2] sm:$0xf] %vm31, %v30
    %s33 = scalar_lea.vmem [#allocation0], 4
    %v34 = vld [vmem:[%s33] ss:$8 sm:$0xf]
    %35 = vrot.lane.b32.xlu0 %v34, 64
    %v36 = vpop.permute.xlu0 %35
    %vm37 = vcmask 654848
    %38 = vst.msk [vmem:[#allocation2] sm:$0xf] %vm37, %v36
    %s39 = scalar_lea.vmem [#allocation0], 3
    %v40 = vld [vmem:[%s39] ss:$8 sm:$0xf]
    %41 = vrot.lane.b32.xlu0 %v40, 48
    %v42 = vpop.permute.xlu0 %41
    %vm43 = vcmask 523648
    %44 = vst.msk [vmem:[#allocation2] sm:$0xf] %vm43, %v42
    %s45 = scalar_lea.vmem [#allocation0], 2
    %v46 = vld [vmem:[%s45] ss:$8 sm:$0xf]
    %47 = vrot.lane.b32.xlu0 %v46, 32
    %v48 = vpop.permute.xlu0 %47
    %vm49 = vcmask 392448
    %50 = vst.msk [vmem:[#allocation2] sm:$0xf] %vm49, %v48
    %s51 = scalar_lea.vmem [#allocation0], 1
    %v52 = vld [vmem:[%s51] ss:$8 sm:$0xf]
    %53 = vrot.lane.b32.xlu0 %v52, 16
    %v54 = vpop.permute.xlu0 %53
    %vm55 = vcmask 261248
    %56 = vst.msk [vmem:[#allocation2] sm:$0xf] %vm55, %v54
    %s58 = sshllo.u32 0, 4
    %v60 = vld [vmem:[#allocation2] sm:%s58]
    %s61 = sshllo.u32 0, 4
    %62 = vst [vmem:[%s1] sm:%s61] %v60
    %63 = vsyncpa [#allocation1], 1

// kernel: binary_focal_loss.1
$region0: #{binary_focal_loss.1}
  #allocation0 [shape = 'u32[]', space=smem, size = 0x4, offset = 0x4, fixed_abs, tag = 'smem constant byte address 0x4 - core index']
  #allocation1 [shape = 'u32[144,128]{1,0:T(1,128)}', space=vmem, size = 0x12000, scoped, tag = 'internal scratch']
  #allocation2 [shape = 'f32[8,128]{1,0:T(8,128)}', space=vmem, size = 0x1000, scoped, tag = 'scratch operand']
  %s0 = inlined_call_operand.vmem [shape: f32[4,128], index: 0, kind: input, shape index: {}]
  %s1 = inlined_call_operand.vmem [shape: f32[4,128], index: 1, kind: input, shape index: {}]
  %s2 = inlined_call_operand.vmem [shape: f32[1,1,128], index: 2, kind: output, shape index: {}]
  %s3 = sld [smem:[#allocation0]]
  $region34: #{binary_focal_loss.1} parent=0
    _
  %s5 = ssub.s32 1, %s3
  %s6 = scalar_select 0, %s5, %s3
  // Predicated region
  $region2: #{binary_focal_loss.1} parent=0 // pred_check
    _
  $region3: #{binary_focal_loss.1} parent=0 // pred_check_branch
    %8 = sbr.rel (0) target = $region5
  $region4: #{binary_focal_loss.1} parent=0 // pred_region
    %s9 = sadd.s32 0, 0
    %s10 = smul.u32 8, %s9
    %s11 = ssub.s32 1, %s10
    %s12 = smul.u32 64, %s11
    %p13 = scmp.lt.s32.totalorder %s10, 0
    %s14 = scalar_select %p13, %s10, 0
    %s15 = smul.addr %s14, 4
    %s16 = scalar_lea.vmem %s0, %s15
    %s17 = sadd.s32 0, 0
    %s18 = smul.u32 8, %s17
    %s19 = ssub.s32 1, %s18
    %s20 = smul.u32 64, %s19
  $region5: #{binary_focal_loss.1} parent=0 // pred_fallthru
    _
  // Predicated region
  $region6: #{binary_focal_loss.1} parent=0 // pred_check
    _
  $region7: #{binary_focal_loss.1} parent=0 // pred_check_branch
    %22 = sbr.rel (0) target = $region9
  $region8: #{binary_focal_loss.1} parent=0 // pred_region
    %s23 = sadd.s32 0, 0
    %s24 = smul.u32 8, %s23
    %s25 = ssub.s32 1, %s24
    %s26 = smul.u32 64, %s25
    %p27 = scmp.lt.s32.totalorder %s24, 0
    %s28 = scalar_select %p27, %s24, 0
    %s29 = smul.addr %s28, 4
    %s30 = scalar_lea.vmem %s1, %s29
    %s31 = sadd.s32 0, 0
    %s32 = smul.u32 8, %s31
    %s33 = ssub.s32 1, %s32
    %s34 = smul.u32 64, %s33
  $region9: #{binary_focal_loss.1} parent=0 // pred_fallthru
    _
  %s35 = sadd.s32 0, 0
  %s36 = smul.u32 8, %s35
  %s37 = ssub.s32 1, %s36
  %s38 = smul.u32 64, %s37
  %p39 = scmp.lt.s32.totalorder %s36, 0
  %s40 = scalar_select %p39, %s36, 0
  %s41 = smul.addr %s40, 4
  %s42 = scalar_lea.vmem %s0, %s41
  %s43 = sadd.s32 0, 0
  %s44 = smul.u32 8, %s43
  %s45 = ssub.s32 1, %s44
  %s46 = smul.u32 64, %s45
  %p47 = scmp.lt.s32.totalorder %s44, 0
  %s48 = scalar_select %p47, %s44, 0
  %s49 = smul.addr %s48, 4
  %s50 = scalar_lea.vmem %s1, %s49
  %s51 = sadd.s32 0, 0
  %s52 = smul.u32 8, %s51
  %s53 = ssub.s32 1, %s52
  %s54 = smul.u32 64, %s53
  %p55 = scmp.lt.s32.totalorder %s52, 0
  %s56 = scalar_select %p55, %s52, 0
  %s57 = smul.addr %s56, 4
  %s58 = scalar_lea.vmem %s0, %s57
  %s59 = sadd.s32 0, 0
  %s60 = smul.u32 8, %s59
  %s61 = ssub.s32 1, %s60
  %s62 = smul.u32 64, %s61
  %s63 = sadd.s32 0, 0
  %s64 = smul.u32 8, %s63
  %s65 = ssub.s32 1, %s64
  %s66 = smul.u32 64, %s65
  %p67 = scmp.lt.s32.totalorder %s64, 0
  %s68 = scalar_select %p67, %s64, 0
  %s69 = smul.addr %s68, 4
  %s70 = scalar_lea.vmem %s1, %s69
  %s71 = sadd.s32 0, 0
  %s72 = smul.u32 8, %s71
  %s73 = ssub.s32 1, %s72
  %s74 = smul.u32 64, %s73
  %p75 = scmp.eq.s32.totalorder 0, 0
  // Predicated region
  $region10: #{binary_focal_loss.1} parent=0 // pred_check
    %p76 = pneg %p75
  $region11: #{binary_focal_loss.1} parent=0 // pred_check_branch
    %78 = sbr.rel (%p76) target = $region13
  $region12: #{binary_focal_loss.1} parent=0 // pred_region
    %79 = vst [vmem:[#allocation2] sm:$0xff] 0.0
  $region13: #{binary_focal_loss.1} parent=0 // pred_fallthru
    _
  %s80 = sadd.s32 0, 0
  %v81 = vld [vmem:[%s58] sm:$0xff]
  %v82 = vld [vmem:[%s58 + $0x8] sm:$0xff]
  %v83 = vld [vmem:[%s58 + $0x10] sm:$0xff]
  %v84 = vld [vmem:[%s58 + $0x18] sm:$0xff]
  %v85 = vld [vmem:[%s70] sm:$0xff]
  %v86 = vld [vmem:[%s70 + $0x8] sm:$0xff]
  %v87 = vld [vmem:[%s70 + $0x10] sm:$0xff]
  %v88 = vld [vmem:[%s70 + $0x18] sm:$0xff]
  %v89 = vmax.f32 %v81, 0.0
  %v90 = vmax.f32 %v82, 0.0
  %v91 = vmax.f32 %v83, 0.0
  %v92 = vmax.f32 %v84, 0.0
  %v93 = vmul.f32 %v81, %v85
  %v94 = vmul.f32 %v82, %v86
  %v95 = vmul.f32 %v83, %v87
  %v96 = vmul.f32 %v84, %v88
  %v97 = vsub.f32 %v89, %v93
  %v98 = vsub.f32 %v90, %v94
  %v99 = vsub.f32 %v91, %v95
  %v100 = vsub.f32 %v92, %v96
  %v101 = vand.u32 2147483647, %v81
  %v102 = vand.u32 2147483647, %v82
  %v103 = vand.u32 2147483647, %v83
  %v104 = vand.u32 2147483647, %v84
  %v105 = vsub.f32 0.0, %v101
  %v106 = vsub.f32 0.0, %v102
  %v107 = vsub.f32 0.0, %v103
  %v108 = vsub.f32 0.0, %v104
  %v109 = vmul.f32 %v105, 1.442695
  %v110 = vpow.pop %v109
  %v111 = vmul.f32 %v106, 1.442695
  %v112 = vpow.pop %v111
  %v113 = vmul.f32 %v107, 1.442695
  %v114 = vpow.pop %v113
  %v115 = vmul.f32 %v108, 1.442695
  %v116 = vpow.pop %v115
  %v117 = vadd.f32 %v110, 1.0
  %v118 = vlog2.pop %v117
  %v119 = vmul.f32 %v118, 0.6931472
  %v120 = vmul.f32 -0.5, %v110
  %v121 = vadd.f32 %v120, 1.0
  %v122 = vmul.f32 %v121, %v110
  %v123 = vand.u32 2147483647, %v110
  %vm124 = vcmp.lt.f32.partialorder %v123, 0.0004427343
  %v125 = vsel %vm124, %v122, %v119
  %v126 = vadd.f32 %v112, 1.0
  %v127 = vlog2.pop %v126
  %v128 = vmul.f32 %v127, 0.6931472
  %v129 = vmul.f32 -0.5, %v112
  %v130 = vadd.f32 %v129, 1.0
  %v131 = vmul.f32 %v130, %v112
  %v132 = vand.u32 2147483647, %v112
  %vm133 = vcmp.lt.f32.partialorder %v132, 0.0004427343
  %v134 = vsel %vm133, %v131, %v128
  %v135 = vadd.f32 %v114, 1.0
  %v136 = vlog2.pop %v135
  %v137 = vmul.f32 %v136, 0.6931472
  %v138 = vmul.f32 -0.5, %v114
  %v139 = vadd.f32 %v138, 1.0
  %v140 = vmul.f32 %v139, %v114
  %v141 = vand.u32 2147483647, %v114
  %vm142 = vcmp.lt.f32.partialorder %v141, 0.0004427343
  %v143 = vsel %vm142, %v140, %v137
  %v144 = vadd.f32 %v116, 1.0
  %v145 = vlog2.pop %v144
  %v146 = vmul.f32 %v145, 0.6931472
  %v147 = vmul.f32 -0.5, %v116
  %v148 = vadd.f32 %v147, 1.0
  %v149 = vmul.f32 %v148, %v116
  %v150 = vand.u32 2147483647, %v116
  %vm151 = vcmp.lt.f32.partialorder %v150, 0.0004427343
  %v152 = vsel %vm151, %v149, %v146
  %v153 = vadd.f32 %v97, %v125
  %v154 = vadd.f32 %v98, %v134
  %v155 = vadd.f32 %v99, %v143
  %v156 = vadd.f32 %v100, %v152
  %v157 = vsub.f32 0.0, %v153
  %v158 = vsub.f32 0.0, %v154
  %v159 = vsub.f32 0.0, %v155
  %v160 = vsub.f32 0.0, %v156
  %v161 = vmul.f32 %v157, 1.442695
  %v162 = vpow.pop %v161
  %v163 = vmul.f32 %v158, 1.442695
  %v164 = vpow.pop %v163
  %v165 = vmul.f32 %v159, 1.442695
  %v166 = vpow.pop %v165
  %v167 = vmul.f32 %v160, 1.442695
  %v168 = vpow.pop %v167
  %v169 = vsub.f32 1.0, %v162
  %v170 = vsub.f32 1.0, %v164
  %v171 = vsub.f32 1.0, %v166
  %v172 = vsub.f32 1.0, %v168
  %v173 = vmul.f32 %v169, %v169
  %v174 = vmul.f32 %v170, %v170
  %v175 = vmul.f32 %v171, %v171
  %v176 = vmul.f32 %v172, %v172
  %v177 = vmul.f32 %v173, %v153
  %v178 = vmul.f32 %v174, %v154
  %v179 = vmul.f32 %v175, %v155
  %v180 = vmul.f32 %v176, %v156
  %p181 = scmp.eq.s32.totalorder %s80, 0
  // Predicated region
  $region14: #{binary_focal_loss.1} parent=0 // pred_check
    %p182 = pneg %p181
  $region15: #{binary_focal_loss.1} parent=0 // pred_check_branch
    %184 = sbr.rel (%p182) target = $region17
  $region16: #{binary_focal_loss.1} parent=0 // pred_region
    %v185 = vlaneseq
    %v186 = vshrl.u32 %v185, 7
    %v187 = vadd.s32 %v186, 8
    %v188 = vadd.s32 %v186, 16
    %v189 = vadd.s32 %v186, 24
    %v190 = vlaneseq
    %v191 = vand.u32 %v190, 127
    %v192 = vmul.u32 %v186, 128
    %v193 = vmul.u32 %v187, 128
    %v194 = vmul.u32 %v188, 128
    %v195 = vmul.u32 %v189, 128
    %v196 = vadd.s32 %v192, %v191
    %v197 = vadd.s32 %v193, %v191
    %v198 = vadd.s32 %v194, %v191
    %v199 = vadd.s32 %v195, %v191
    %vm200 = vcmp.lt.s32.totalorder %v196, 512
    %vm201 = vcmp.lt.s32.totalorder %v197, 512
    %vm202 = vcmp.lt.s32.totalorder %v198, 512
    %vm203 = vcmp.lt.s32.totalorder %v199, 512
    %v204 = vsel %vm200, %v177, 0.0
    %v205 = vsel %vm201, %v178, 0.0
    %v206 = vsel %vm202, %v179, 0.0
    %v207 = vsel %vm203, %v180, 0.0
    %v208 = vld [vmem:[#allocation2] sm:$0xff]
    %v209 = vadd.f32 %v204, %v205
    %v210 = vadd.f32 %v209, %v206
    %v211 = vadd.f32 %v210, %v207
    %v212 = vadd.f32 %v208, %v211
    %213 = vst [vmem:[#allocation2] sm:$0xff] %v212
  $region17: #{binary_focal_loss.1} parent=0 // pred_fallthru
    _
  %p214 = scmp.ne.s32.totalorder %s80, 0
  // Predicated region
  $region18: #{binary_focal_loss.1} parent=0 // pred_check
    %p215 = pneg %p214
  $region19: #{binary_focal_loss.1} parent=0 // pred_check_branch
    %217 = sbr.rel (%p215) target = $region21
  $region20: #{binary_focal_loss.1} parent=0 // pred_region
    %v218 = vld [vmem:[#allocation2] sm:$0xff]
    %v219 = vadd.f32 %v177, %v178
    %v220 = vadd.f32 %v219, %v179
    %v221 = vadd.f32 %v220, %v180
    %v222 = vadd.f32 %v218, %v221
    %223 = vst [vmem:[#allocation2] sm:$0xff] %v222
  $region21: #{binary_focal_loss.1} parent=0 // pred_fallthru
    _
  // Predicated region
  $region22: #{binary_focal_loss.1} parent=0 // pred_check
    %p224 = pneg %p75
  $region23: #{binary_focal_loss.1} parent=0 // pred_check_branch
    %226 = sbr.rel (%p224) target = $region25
  $region24: #{binary_focal_loss.1} parent=0 // pred_region
    %v227 = vld [vmem:[#allocation2] sm:$0xff]
    %v228 = vrot.slane %v227, 4
    %v229 = vadd.f32 %v227, %v228
    %v230 = vrot.slane %v229, 2
    %v231 = vadd.f32 %v229, %v230
    %v232 = vrot.slane %v231, 1
    %v233 = vadd.f32 %v231, %v232
    %234 = vst [vmem:[%s2] sm:$0x1] %v233
  $region25: #{binary_focal_loss.1} parent=0 // pred_fallthru
    _
  // Predicated region
  $region26: #{binary_focal_loss.1} parent=0 // pred_check
    _
  $region27: #{binary_focal_loss.1} parent=0 // pred_check_branch
    %236 = sbr.rel (0) target = $region29
  $region28: #{binary_focal_loss.1} parent=0 // pred_region
    _
  $region29: #{binary_focal_loss.1} parent=0 // pred_fallthru
    _
  // Predicated region
  $region30: #{binary_focal_loss.1} parent=0 // pred_check
    _
  $region31: #{binary_focal_loss.1} parent=0 // pred_check_branch
    %238 = sbr.rel (0) target = $region33
  $region32: #{binary_focal_loss.1} parent=0 // pred_region
    _
  $region33: #{binary_focal_loss.1} parent=0 // pred_fallthru
    _

</llo_original>
